<compile_context>
chip_gen: v7x
topology: tpu7x:2x2x1
jax: 0.10.0
libtpu: 0.0.40
codegen_flags: <defaults>
</compile_context>

<pallas_src>
import functools

import jax
import jax.numpy as jnp
from jax import lax
from jax.experimental import pallas as pl
from jax.experimental.pallas import tpu as pltpu

LANE = 128        # TPU lane width; per-action atom block padded to a multiple of it
NEG_BIG = -1e30   # fill for padded atom lanes: never the max, exp() -> 0


def _round_up(x: int, m: int) -> int:
    return ((x + m - 1) // m) * m


def dqn_kernel(x_ref, w1_ref, b1_ref, w2_ref, b2_ref, w3_ref, b3_ref,
               sup_ref, q_ref, *, out_dim: int, atoms_pad: int):
    """C51 head: 3-layer MLP trunk + per-action softmax / clamp / expectation."""
    # ---- MLP trunk: bf16 MXU matmuls with f32 accumulation ----
    h1 = jnp.dot(x_ref[...], w1_ref[...],
                 preferred_element_type=jnp.float32) + b1_ref[...]
    h1 = jnp.maximum(h1, 0.0).astype(jnp.bfloat16)
    h2 = jnp.dot(h1, w2_ref[...],
                 preferred_element_type=jnp.float32) + b2_ref[...]
    h2 = jnp.maximum(h2, 0.0).astype(jnp.bfloat16)
    logits = jnp.dot(h2, w3_ref[...],
                     preferred_element_type=jnp.float32) + b3_ref[...]
    # logits: (Bb, out_dim * atoms_pad); padded lanes hold NEG_BIG.

    sup = sup_ref[...]                                     # (1, atoms_pad), pads = 0
    bb = q_ref.shape[0]
    col = lax.broadcasted_iota(jnp.int32, (bb, LANE), 1)
    q = jnp.zeros((bb, LANE), jnp.float32)

    # out_dim is small & static -> static loop; every slice is 128-lane aligned.
    for a in range(out_dim):
        seg = logits[:, a * atoms_pad:(a + 1) * atoms_pad]   # (Bb, atoms_pad)
        m = jnp.max(seg, axis=-1, keepdims=True)             # pads never win
        e = jnp.exp(seg - m)                                  # padded lanes -> 0
        denom = jnp.sum(e, axis=-1, keepdims=True)
        dist = e * pl.reciprocal(denom, approx=False)
        dist = jnp.maximum(dist, 0.001)                       # torch .clamp(min=0.001)
        qa = jnp.sum(dist * sup, axis=-1, keepdims=True)      # padded lanes * 0
        q = jnp.where(col == a, qa, q)                        # place into lane `a`
    q_ref[...] = q                                            # single aligned store


def distributional_dqn_forward(x, w1, b1, w2, b2, w3, b3, support,
                               *, out_dim: int, atom_size: int):
    batch, in_dim = x.shape
    hidden = w1.shape[1]
    assert out_dim <= LANE, "q output is padded to a single 128-lane vreg"
    atoms_pad = _round_up(atom_size, LANE)

    # --- lane-aligned atom layout: action a's atoms live at lanes [a*atoms_pad, ...] ---
    w3p = jnp.pad(w3.reshape(hidden, out_dim, atom_size),
                  ((0, 0), (0, 0), (0, atoms_pad - atom_size))
                  ).reshape(hidden, out_dim * atoms_pad)
    b3p = jnp.pad(b3.reshape(1, out_dim, atom_size).astype(jnp.float32),
                  ((0, 0), (0, 0), (0, atoms_pad - atom_size)),
                  constant_values=NEG_BIG
                  ).reshape(1, out_dim * atoms_pad)
    supp = jnp.pad(support.reshape(1, atom_size).astype(jnp.float32),
                   ((0, 0), (0, atoms_pad - atom_size)))

    # bf16 weights & input for the MXU (halves weight DMA); biases stay f32.
    xb = x.astype(jnp.bfloat16)
    w1b = w1.astype(jnp.bfloat16)
    w2b = w2.astype(jnp.bfloat16)
    w3b = w3p.astype(jnp.bfloat16)
    b1f = b1.astype(jnp.float32)
    b2f = b2.astype(jnp.float32)

    # --- batch tiling: grid over row tiles, weights resident via constant maps ---
    block_b = min(128, _round_up(batch, 8))
    padded_b = _round_up(batch, block_b)
    if padded_b != batch:
        xb = jnp.pad(xb, ((0, padded_b - batch), (0, 0)))
    grid = (padded_b // block_b,)

    kernel = functools.partial(dqn_kernel, out_dim=out_dim, atoms_pad=atoms_pad)
    const2d = lambda arr: pl.BlockSpec(arr.shape, lambda i: (0, 0))

    q_pad = pl.pallas_call(
        kernel,
        out_shape=jax.ShapeDtypeStruct((padded_b, LANE), jnp.float32),
        grid=grid,
        in_specs=[
            pl.BlockSpec((block_b, in_dim), lambda i: (i, 0)),   # x: tiled over batch
            const2d(w1b), const2d(b1f),
            const2d(w2b), const2d(b2f),
            const2d(w3b), const2d(b3p),
            const2d(supp),
        ],
        out_specs=pl.BlockSpec((block_b, LANE), lambda i: (i, 0)),
        compiler_params=pltpu.CompilerParams(
            dimension_semantics=("parallel",)),                  # v7x megacore-ready
    )(xb, w1b, b1f, w2b, b2f, w3b, b3p, supp)

    return q_pad[:batch, :out_dim]


def reference_forward(x, w1, b1, w2, b2, w3, b3, support, *, out_dim, atom_size,
                      matmul_dtype=jnp.float32):
    """Pure-JAX reference of the PyTorch module.  matmul_dtype=bfloat16 mirrors
    the kernel's mixed-precision matmul inputs (f32 accumulation)."""
    def mm(a, b):
        return jnp.dot(a.astype(matmul_dtype), b.astype(matmul_dtype),
                       preferred_element_type=jnp.float32,
                       precision=lax.Precision.HIGHEST)
    h1 = jax.nn.relu(mm(x, w1) + b1)
    h2 = jax.nn.relu(mm(h1, w2) + b2)
    q_atoms = (mm(h2, w3) + b3).reshape(-1, out_dim, atom_size)
    dist = jax.nn.softmax(q_atoms, axis=-1)
    dist = jnp.maximum(dist, 0.001)          # torch .clamp(min=0.001)
    return jnp.sum(dist * support.reshape(1, 1, atom_size), axis=2)


if __name__ == "__main__":
    IN_DIM, OUT_DIM, ATOM_SIZE, HIDDEN, BATCH = 16, 4, 51, 128, 8

    key = jax.random.PRNGKey(0)
    k = jax.random.split(key, 8)

    x = jax.random.normal(k[0], (BATCH, IN_DIM), dtype=jnp.float32)
    # nn.Linear parameters stored as (in, out); biases as (1, out).
    w1 = jax.random.normal(k[1], (IN_DIM, HIDDEN), dtype=jnp.float32) * 0.1
    b1 = jax.random.normal(k[2], (1, HIDDEN), dtype=jnp.float32) * 0.01
    w2 = jax.random.normal(k[3], (HIDDEN, HIDDEN), dtype=jnp.float32) * 0.1
    b2 = jax.random.normal(k[4], (1, HIDDEN), dtype=jnp.float32) * 0.01
    w3 = jax.random.normal(k[5], (HIDDEN, OUT_DIM * ATOM_SIZE), dtype=jnp.float32) * 0.1
    b3 = jax.random.normal(k[6], (1, OUT_DIM * ATOM_SIZE), dtype=jnp.float32) * 0.01
    # C51 support, e.g. v_min=0, v_max=10.
    support = jnp.linspace(0.0, 10.0, ATOM_SIZE, dtype=jnp.float32)

    fwd = jax.jit(functools.partial(distributional_dqn_forward,
                                    out_dim=OUT_DIM, atom_size=ATOM_SIZE))
    q = jax.block_until_ready(fwd(x, w1, b1, w2, b2, w3, b3, support))
    assert q.shape == (BATCH, OUT_DIM)

    # Precision-matched check: reference with the same bf16 matmul inputs / f32 accum.
    q_bf16 = reference_forward(x, w1, b1, w2, b2, w3, b3, support,
                               out_dim=OUT_DIM, atom_size=ATOM_SIZE,
                               matmul_dtype=jnp.bfloat16)
    assert jnp.allclose(q, q_bf16, atol=1e-3, rtol=1e-3), (q, q_bf16)

    # Semantic sanity check vs. the full-f32 reference (only bf16 rounding differs).
    q_f32 = reference_forward(x, w1, b1, w2, b2, w3, b3, support,
                              out_dim=OUT_DIM, atom_size=ATOM_SIZE,
                              matmul_dtype=jnp.float32)
    assert jnp.allclose(q, q_f32, atol=1e-1, rtol=1e-1), (q, q_f32)

    print("KERNEL_OK")
</pallas_src>

<mosaic_0001>
module attributes {stable_mosaic.version = 11 : i64} {
  func.func @dqn_kernel(%arg0: i32, %arg1: memref<8x16xbf16, #tpu.memory_space<vmem>>, %arg2: memref<16x128xbf16, #tpu.memory_space<vmem>>, %arg3: memref<1x128xf32, #tpu.memory_space<vmem>>, %arg4: memref<128x128xbf16, #tpu.memory_space<vmem>>, %arg5: memref<1x128xf32, #tpu.memory_space<vmem>>, %arg6: memref<128x512xbf16, #tpu.memory_space<vmem>>, %arg7: memref<1x512xf32, #tpu.memory_space<vmem>>, %arg8: memref<1x128xf32, #tpu.memory_space<vmem>>, %arg9: memref<8x128xf32, #tpu.memory_space<vmem>>) attributes {dimension_semantics = [#tpu.dimension_semantics<parallel>], iteration_bounds = array<i64: 1>, scalar_prefetch = 0 : i64, scratch_operands = 0 : i64, tpu.core_type = #tpu.core_type<tc>, window_params = [{transform_indices = @transform_0, window_bounds = array<i64: 8, 16>}, {pipeline_mode = #tpu.pipeline_mode<synchronous>, transform_indices = @transform_1, window_bounds = array<i64: 16, 128>}, {pipeline_mode = #tpu.pipeline_mode<synchronous>, transform_indices = @transform_2, window_bounds = array<i64: 1, 128>}, {pipeline_mode = #tpu.pipeline_mode<synchronous>, transform_indices = @transform_3, window_bounds = array<i64: 128, 128>}, {pipeline_mode = #tpu.pipeline_mode<synchronous>, transform_indices = @transform_4, window_bounds = array<i64: 1, 128>}, {pipeline_mode = #tpu.pipeline_mode<synchronous>, transform_indices = @transform_5, window_bounds = array<i64: 128, 512>}, {pipeline_mode = #tpu.pipeline_mode<synchronous>, transform_indices = @transform_6, window_bounds = array<i64: 1, 512>}, {pipeline_mode = #tpu.pipeline_mode<synchronous>, transform_indices = @transform_7, window_bounds = array<i64: 1, 128>}, {transform_indices = @transform_8, window_bounds = array<i64: 8, 128>}]} {
    %c0 = arith.constant 0 : index
    %c0_0 = arith.constant 0 : index
    %0 = vector.load %arg1[%c0, %c0_0] : memref<8x16xbf16, #tpu.memory_space<vmem>>, vector<8x16xbf16>
    %c0_1 = arith.constant 0 : index
    %c0_2 = arith.constant 0 : index
    %1 = vector.load %arg2[%c0_1, %c0_2] : memref<16x128xbf16, #tpu.memory_space<vmem>>, vector<16x128xbf16>
    %cst = arith.constant dense<0.000000e+00> : vector<8x128xf32>
    %2 = tpu.matmul %0, %1, %cst {dimension_numbers = #tpu.dot_dimension_numbers<[1], [0], [0], [1], [0, 0, 1, 1], [], []>} : vector<8x16xbf16>, vector<16x128xbf16>, vector<8x128xf32> -> vector<8x128xf32>
    %c0_3 = arith.constant 0 : index
    %c0_4 = arith.constant 0 : index
    %3 = vector.load %arg3[%c0_3, %c0_4] : memref<1x128xf32, #tpu.memory_space<vmem>>, vector<1x128xf32>
    %4 = vector.broadcast %3 : vector<1x128xf32> to vector<8x128xf32>
    %5 = arith.addf %2, %4 : vector<8x128xf32>
    %cst_5 = arith.constant 0.000000e+00 : f32
    %6 = vector.broadcast %cst_5 : f32 to vector<8x128xf32>
    %7 = arith.maximumf %5, %6 : vector<8x128xf32>
    %8 = arith.truncf %7 : vector<8x128xf32> to vector<8x128xbf16>
    %c0_6 = arith.constant 0 : index
    %c0_7 = arith.constant 0 : index
    %9 = vector.load %arg4[%c0_6, %c0_7] : memref<128x128xbf16, #tpu.memory_space<vmem>>, vector<128x128xbf16>
    %cst_8 = arith.constant dense<0.000000e+00> : vector<8x128xf32>
    %10 = tpu.matmul %8, %9, %cst_8 {dimension_numbers = #tpu.dot_dimension_numbers<[1], [0], [0], [1], [0, 0, 1, 1], [], []>} : vector<8x128xbf16>, vector<128x128xbf16>, vector<8x128xf32> -> vector<8x128xf32>
    %c0_9 = arith.constant 0 : index
    %c0_10 = arith.constant 0 : index
    %11 = vector.load %arg5[%c0_9, %c0_10] : memref<1x128xf32, #tpu.memory_space<vmem>>, vector<1x128xf32>
    %12 = vector.broadcast %11 : vector<1x128xf32> to vector<8x128xf32>
    %13 = arith.addf %10, %12 : vector<8x128xf32>
    %cst_11 = arith.constant 0.000000e+00 : f32
    %14 = vector.broadcast %cst_11 : f32 to vector<8x128xf32>
    %15 = arith.maximumf %13, %14 : vector<8x128xf32>
    %16 = arith.truncf %15 : vector<8x128xf32> to vector<8x128xbf16>
    %c0_12 = arith.constant 0 : index
    %c0_13 = arith.constant 0 : index
    %17 = vector.load %arg6[%c0_12, %c0_13] : memref<128x512xbf16, #tpu.memory_space<vmem>>, vector<128x512xbf16>
    %cst_14 = arith.constant dense<0.000000e+00> : vector<8x512xf32>
    %18 = tpu.matmul %16, %17, %cst_14 {dimension_numbers = #tpu.dot_dimension_numbers<[1], [0], [0], [1], [0, 0, 1, 1], [], []>} : vector<8x128xbf16>, vector<128x512xbf16>, vector<8x512xf32> -> vector<8x512xf32>
    %c0_15 = arith.constant 0 : index
    %c0_16 = arith.constant 0 : index
    %19 = vector.load %arg7[%c0_15, %c0_16] : memref<1x512xf32, #tpu.memory_space<vmem>>, vector<1x512xf32>
    %20 = vector.broadcast %19 : vector<1x512xf32> to vector<8x512xf32>
    %21 = arith.addf %18, %20 : vector<8x512xf32>
    %c0_17 = arith.constant 0 : index
    %c0_18 = arith.constant 0 : index
    %22 = vector.load %arg8[%c0_17, %c0_18] : memref<1x128xf32, #tpu.memory_space<vmem>>, vector<1x128xf32>
    %23 = tpu.iota {dimensions = array<i32: 1>} : vector<8x128xi32>
    %cst_19 = arith.constant 0.000000e+00 : f32
    %24 = vector.broadcast %cst_19 : f32 to vector<8x128xf32>
    %25 = vector.extract_strided_slice %21 {offsets = [0, 0], sizes = [8, 128], strides = [1, 1]} : vector<8x512xf32> to vector<8x128xf32>
    %cst_20 = arith.constant dense<0xFF800000> : vector<8xf32>
    %26 = vector.multi_reduction <maximumf>, %25, %cst_20 [1] : vector<8x128xf32> to vector<8xf32>
    %27 = vector.shape_cast %26 : vector<8xf32> to vector<8x1xf32>
    %28 = vector.broadcast %27 : vector<8x1xf32> to vector<8x128xf32>
    %29 = arith.subf %25, %28 : vector<8x128xf32>
    %30 = math.exp %29 : vector<8x128xf32>
    %cst_21 = arith.constant dense<0.000000e+00> : vector<8xf32>
    %31 = vector.multi_reduction <add>, %30, %cst_21 [1] : vector<8x128xf32> to vector<8xf32>
    %32 = vector.shape_cast %31 : vector<8xf32> to vector<8x1xf32>
    %33 = tpu.reciprocal %32 : vector<8x1xf32> -> vector<8x1xf32>
    %34 = vector.broadcast %33 : vector<8x1xf32> to vector<8x128xf32>
    %35 = arith.mulf %30, %34 : vector<8x128xf32>
    %cst_22 = arith.constant 1.000000e-03 : f32
    %36 = vector.broadcast %cst_22 : f32 to vector<8x128xf32>
    %37 = arith.maximumf %35, %36 : vector<8x128xf32>
    %38 = vector.broadcast %22 : vector<1x128xf32> to vector<8x128xf32>
    %39 = arith.mulf %37, %38 : vector<8x128xf32>
    %cst_23 = arith.constant dense<0.000000e+00> : vector<8xf32>
    %40 = vector.multi_reduction <add>, %39, %cst_23 [1] : vector<8x128xf32> to vector<8xf32>
    %41 = vector.shape_cast %40 : vector<8xf32> to vector<8x1xf32>
    %c0_i32 = arith.constant 0 : i32
    %42 = vector.broadcast %c0_i32 : i32 to vector<8x128xi32>
    %43 = arith.cmpi eq, %23, %42 : vector<8x128xi32>
    %44 = vector.shape_cast %41 : vector<8x1xf32> to vector<8x1xf32>
    %45 = vector.broadcast %44 : vector<8x1xf32> to vector<8x128xf32>
    %46 = arith.select %43, %45, %24 : vector<8x128xi1>, vector<8x128xf32>
    %47 = vector.extract_strided_slice %21 {offsets = [0, 128], sizes = [8, 128], strides = [1, 1]} : vector<8x512xf32> to vector<8x128xf32>
    %cst_24 = arith.constant dense<0xFF800000> : vector<8xf32>
    %48 = vector.multi_reduction <maximumf>, %47, %cst_24 [1] : vector<8x128xf32> to vector<8xf32>
    %49 = vector.shape_cast %48 : vector<8xf32> to vector<8x1xf32>
    %50 = vector.broadcast %49 : vector<8x1xf32> to vector<8x128xf32>
    %51 = arith.subf %47, %50 : vector<8x128xf32>
    %52 = math.exp %51 : vector<8x128xf32>
    %cst_25 = arith.constant dense<0.000000e+00> : vector<8xf32>
    %53 = vector.multi_reduction <add>, %52, %cst_25 [1] : vector<8x128xf32> to vector<8xf32>
    %54 = vector.shape_cast %53 : vector<8xf32> to vector<8x1xf32>
    %55 = tpu.reciprocal %54 : vector<8x1xf32> -> vector<8x1xf32>
    %56 = vector.broadcast %55 : vector<8x1xf32> to vector<8x128xf32>
    %57 = arith.mulf %52, %56 : vector<8x128xf32>
    %cst_26 = arith.constant 1.000000e-03 : f32
    %58 = vector.broadcast %cst_26 : f32 to vector<8x128xf32>
    %59 = arith.maximumf %57, %58 : vector<8x128xf32>
    %60 = vector.broadcast %22 : vector<1x128xf32> to vector<8x128xf32>
    %61 = arith.mulf %59, %60 : vector<8x128xf32>
    %cst_27 = arith.constant dense<0.000000e+00> : vector<8xf32>
    %62 = vector.multi_reduction <add>, %61, %cst_27 [1] : vector<8x128xf32> to vector<8xf32>
    %63 = vector.shape_cast %62 : vector<8xf32> to vector<8x1xf32>
    %c1_i32 = arith.constant 1 : i32
    %64 = vector.broadcast %c1_i32 : i32 to vector<8x128xi32>
    %65 = arith.cmpi eq, %23, %64 : vector<8x128xi32>
    %66 = vector.shape_cast %63 : vector<8x1xf32> to vector<8x1xf32>
    %67 = vector.broadcast %66 : vector<8x1xf32> to vector<8x128xf32>
    %68 = arith.select %65, %67, %46 : vector<8x128xi1>, vector<8x128xf32>
    %69 = vector.extract_strided_slice %21 {offsets = [0, 256], sizes = [8, 128], strides = [1, 1]} : vector<8x512xf32> to vector<8x128xf32>
    %cst_28 = arith.constant dense<0xFF800000> : vector<8xf32>
    %70 = vector.multi_reduction <maximumf>, %69, %cst_28 [1] : vector<8x128xf32> to vector<8xf32>
    %71 = vector.shape_cast %70 : vector<8xf32> to vector<8x1xf32>
    %72 = vector.broadcast %71 : vector<8x1xf32> to vector<8x128xf32>
    %73 = arith.subf %69, %72 : vector<8x128xf32>
    %74 = math.exp %73 : vector<8x128xf32>
    %cst_29 = arith.constant dense<0.000000e+00> : vector<8xf32>
    %75 = vector.multi_reduction <add>, %74, %cst_29 [1] : vector<8x128xf32> to vector<8xf32>
    %76 = vector.shape_cast %75 : vector<8xf32> to vector<8x1xf32>
    %77 = tpu.reciprocal %76 : vector<8x1xf32> -> vector<8x1xf32>
    %78 = vector.broadcast %77 : vector<8x1xf32> to vector<8x128xf32>
    %79 = arith.mulf %74, %78 : vector<8x128xf32>
    %cst_30 = arith.constant 1.000000e-03 : f32
    %80 = vector.broadcast %cst_30 : f32 to vector<8x128xf32>
    %81 = arith.maximumf %79, %80 : vector<8x128xf32>
    %82 = vector.broadcast %22 : vector<1x128xf32> to vector<8x128xf32>
    %83 = arith.mulf %81, %82 : vector<8x128xf32>
    %cst_31 = arith.constant dense<0.000000e+00> : vector<8xf32>
    %84 = vector.multi_reduction <add>, %83, %cst_31 [1] : vector<8x128xf32> to vector<8xf32>
    %85 = vector.shape_cast %84 : vector<8xf32> to vector<8x1xf32>
    %c2_i32 = arith.constant 2 : i32
    %86 = vector.broadcast %c2_i32 : i32 to vector<8x128xi32>
    %87 = arith.cmpi eq, %23, %86 : vector<8x128xi32>
    %88 = vector.shape_cast %85 : vector<8x1xf32> to vector<8x1xf32>
    %89 = vector.broadcast %88 : vector<8x1xf32> to vector<8x128xf32>
    %90 = arith.select %87, %89, %68 : vector<8x128xi1>, vector<8x128xf32>
    %91 = vector.extract_strided_slice %21 {offsets = [0, 384], sizes = [8, 128], strides = [1, 1]} : vector<8x512xf32> to vector<8x128xf32>
    %cst_32 = arith.constant dense<0xFF800000> : vector<8xf32>
    %92 = vector.multi_reduction <maximumf>, %91, %cst_32 [1] : vector<8x128xf32> to vector<8xf32>
    %93 = vector.shape_cast %92 : vector<8xf32> to vector<8x1xf32>
    %94 = vector.broadcast %93 : vector<8x1xf32> to vector<8x128xf32>
    %95 = arith.subf %91, %94 : vector<8x128xf32>
    %96 = math.exp %95 : vector<8x128xf32>
    %cst_33 = arith.constant dense<0.000000e+00> : vector<8xf32>
    %97 = vector.multi_reduction <add>, %96, %cst_33 [1] : vector<8x128xf32> to vector<8xf32>
    %98 = vector.shape_cast %97 : vector<8xf32> to vector<8x1xf32>
    %99 = tpu.reciprocal %98 : vector<8x1xf32> -> vector<8x1xf32>
    %100 = vector.broadcast %99 : vector<8x1xf32> to vector<8x128xf32>
    %101 = arith.mulf %96, %100 : vector<8x128xf32>
    %cst_34 = arith.constant 1.000000e-03 : f32
    %102 = vector.broadcast %cst_34 : f32 to vector<8x128xf32>
    %103 = arith.maximumf %101, %102 : vector<8x128xf32>
    %104 = vector.broadcast %22 : vector<1x128xf32> to vector<8x128xf32>
    %105 = arith.mulf %103, %104 : vector<8x128xf32>
    %cst_35 = arith.constant dense<0.000000e+00> : vector<8xf32>
    %106 = vector.multi_reduction <add>, %105, %cst_35 [1] : vector<8x128xf32> to vector<8xf32>
    %107 = vector.shape_cast %106 : vector<8xf32> to vector<8x1xf32>
    %c3_i32 = arith.constant 3 : i32
    %108 = vector.broadcast %c3_i32 : i32 to vector<8x128xi32>
    %109 = arith.cmpi eq, %23, %108 : vector<8x128xi32>
    %110 = vector.shape_cast %107 : vector<8x1xf32> to vector<8x1xf32>
    %111 = vector.broadcast %110 : vector<8x1xf32> to vector<8x128xf32>
    %112 = arith.select %109, %111, %90 : vector<8x128xi1>, vector<8x128xf32>
    %c0_36 = arith.constant 0 : index
    %c0_37 = arith.constant 0 : index
    %113 = vector.load %arg9[%c0_36, %c0_37] : memref<8x128xf32, #tpu.memory_space<vmem>>, vector<8x128xf32>
    tpu.vector_store %arg9[%c0_36, %c0_37], %112 {strides = array<i32>} : memref<8x128xf32, #tpu.memory_space<vmem>>, vector<8x128xf32>,
    return
  }
  func.func @transform_0(%arg0: i32) -> (i32, i32) {
    %c0_i32 = arith.constant 0 : i32
    %c0_i32_0 = arith.constant 0 : i32
    return %arg0, %c0_i32 : i32, i32
  }
  func.func @transform_1(%arg0: i32) -> (i32, i32) {
    %c0_i32 = arith.constant 0 : i32
    %c0_i32_0 = arith.constant 0 : i32
    %c0_i32_1 = arith.constant 0 : i32
    return %c0_i32, %c0_i32_0 : i32, i32
  }
  func.func @transform_2(%arg0: i32) -> (i32, i32) {
    %c0_i32 = arith.constant 0 : i32
    %c0_i32_0 = arith.constant 0 : i32
    %c0_i32_1 = arith.constant 0 : i32
    return %c0_i32, %c0_i32_0 : i32, i32
  }
  func.func @transform_3(%arg0: i32) -> (i32, i32) {
    %c0_i32 = arith.constant 0 : i32
    %c0_i32_0 = arith.constant 0 : i32
    %c0_i32_1 = arith.constant 0 : i32
    return %c0_i32, %c0_i32_0 : i32, i32
  }
  func.func @transform_4(%arg0: i32) -> (i32, i32) {
    %c0_i32 = arith.constant 0 : i32
    %c0_i32_0 = arith.constant 0 : i32
    %c0_i32_1 = arith.constant 0 : i32
    return %c0_i32, %c0_i32_0 : i32, i32
  }
  func.func @transform_5(%arg0: i32) -> (i32, i32) {
    %c0_i32 = arith.constant 0 : i32
    %c0_i32_0 = arith.constant 0 : i32
    %c0_i32_1 = arith.constant 0 : i32
    return %c0_i32, %c0_i32_0 : i32, i32
  }
  func.func @transform_6(%arg0: i32) -> (i32, i32) {
    %c0_i32 = arith.constant 0 : i32
    %c0_i32_0 = arith.constant 0 : i32
    %c0_i32_1 = arith.constant 0 : i32
    return %c0_i32, %c0_i32_0 : i32, i32
  }
  func.func @transform_7(%arg0: i32) -> (i32, i32) {
    %c0_i32 = arith.constant 0 : i32
    %c0_i32_0 = arith.constant 0 : i32
    %c0_i32_1 = arith.constant 0 : i32
    return %c0_i32, %c0_i32_0 : i32, i32
  }
  func.func @transform_8(%arg0: i32) -> (i32, i32) {
    %c0_i32 = arith.constant 0 : i32
    %c0_i32_0 = arith.constant 0 : i32
    return %arg0, %c0_i32 : i32, i32
  }
}

</mosaic_0001>

<llo_original>
// kernel: distributional_dqn_forward.1
$region0: #{distributional_dqn_forward.1}
  #allocation0 [shape = 'u32[]', space=smem, size = 0x4, offset = 0x4, fixed_abs, tag = 'smem constant byte address 0x4 - core index']
  #allocation1 [shape = 'u32[144,128]{1,0:T(1,128)}', space=vmem, size = 0x12000, scoped, tag = 'internal scratch']
  %s0 = inlined_call_operand.vmem [shape: bf16[8,16], index: 0, kind: input, shape index: {}]
  %s1 = inlined_call_operand.vmem [shape: bf16[16,128], index: 1, kind: input, shape index: {}]
  %s2 = inlined_call_operand.vmem [shape: f32[1,128], index: 2, kind: input, shape index: {}]
  %s3 = inlined_call_operand.vmem [shape: bf16[128,128], index: 3, kind: input, shape index: {}]
  %s4 = inlined_call_operand.vmem [shape: f32[1,128], index: 4, kind: input, shape index: {}]
  %s5 = inlined_call_operand.vmem [shape: bf16[128,512], index: 5, kind: input, shape index: {}]
  %s6 = inlined_call_operand.vmem [shape: f32[1,512], index: 6, kind: input, shape index: {}]
  %s7 = inlined_call_operand.vmem [shape: f32[1,128], index: 7, kind: input, shape index: {}]
  %s8 = inlined_call_operand.vmem [shape: f32[8,128], index: 8, kind: output, shape index: {}]
  %s9 = sld [smem:[#allocation0]]
  $region42: #{distributional_dqn_forward.1} parent=0
    _
  %s11 = ssub.s32 1, %s9
  %s12 = scalar_select 0, %s11, %s9
  // Predicated region
  $region2: #{distributional_dqn_forward.1} parent=0 // pred_check
    _
  $region3: #{distributional_dqn_forward.1} parent=0 // pred_check_branch
    %14 = sbr.rel (0) target = $region5
  $region4: #{distributional_dqn_forward.1} parent=0 // pred_region
    _
  $region5: #{distributional_dqn_forward.1} parent=0 // pred_fallthru
    _
  // Predicated region
  $region6: #{distributional_dqn_forward.1} parent=0 // pred_check
    _
  $region7: #{distributional_dqn_forward.1} parent=0 // pred_check_branch
    %16 = sbr.rel (0) target = $region9
  $region8: #{distributional_dqn_forward.1} parent=0 // pred_region
    _
  $region9: #{distributional_dqn_forward.1} parent=0 // pred_fallthru
    _
  // Predicated region
  $region10: #{distributional_dqn_forward.1} parent=0 // pred_check
    _
  $region11: #{distributional_dqn_forward.1} parent=0 // pred_check_branch
    %18 = sbr.rel (0) target = $region13
  $region12: #{distributional_dqn_forward.1} parent=0 // pred_region
    _
  $region13: #{distributional_dqn_forward.1} parent=0 // pred_fallthru
    _
  // Predicated region
  $region14: #{distributional_dqn_forward.1} parent=0 // pred_check
    _
  $region15: #{distributional_dqn_forward.1} parent=0 // pred_check_branch
    %20 = sbr.rel (0) target = $region17
  $region16: #{distributional_dqn_forward.1} parent=0 // pred_region
    _
  $region17: #{distributional_dqn_forward.1} parent=0 // pred_fallthru
    _
  // Predicated region
  $region18: #{distributional_dqn_forward.1} parent=0 // pred_check
    _
  $region19: #{distributional_dqn_forward.1} parent=0 // pred_check_branch
    %22 = sbr.rel (0) target = $region21
  $region20: #{distributional_dqn_forward.1} parent=0 // pred_region
    _
  $region21: #{distributional_dqn_forward.1} parent=0 // pred_fallthru
    _
  // Predicated region
  $region22: #{distributional_dqn_forward.1} parent=0 // pred_check
    _
  $region23: #{distributional_dqn_forward.1} parent=0 // pred_check_branch
    %24 = sbr.rel (0) target = $region25
  $region24: #{distributional_dqn_forward.1} parent=0 // pred_region
    _
  $region25: #{distributional_dqn_forward.1} parent=0 // pred_fallthru
    _
  // Predicated region
  $region26: #{distributional_dqn_forward.1} parent=0 // pred_check
    _
  $region27: #{distributional_dqn_forward.1} parent=0 // pred_check_branch
    %26 = sbr.rel (0) target = $region29
  $region28: #{distributional_dqn_forward.1} parent=0 // pred_region
    _
  $region29: #{distributional_dqn_forward.1} parent=0 // pred_fallthru
    _
  // Predicated region
  $region30: #{distributional_dqn_forward.1} parent=0 // pred_check
    _
  $region31: #{distributional_dqn_forward.1} parent=0 // pred_check_branch
    %28 = sbr.rel (0) target = $region33
  $region32: #{distributional_dqn_forward.1} parent=0 // pred_region
    _
  $region33: #{distributional_dqn_forward.1} parent=0 // pred_fallthru
    _
  %v30 = vld [vmem:[%s0] sm:$0xf]
  %v31 = vld [vmem:[%s1] sm:$0xf]
  %v32 = vld [vmem:[%s1 + $0x4] sm:$0xf]
  %v33 = vld [vmem:[%s2] sm:$0x1]
  %v35 = vlaneseq
  %v36 = vshrl.u32 %v35, 7
  %v37 = vsub.s32 0, %v36
  %v38 = vrot.slane %v33, %v37
  %v42 = vunpack.c.l.b16 %v31
  %v43 = vunpack.c.l.b16 %v32
  %v44 = vpack.c.b16 %v43, %v42
  %vm46 = vcmask 130048
  %v48 = vsel %vm46, %v30, 0
  %50 = vmatprep.subr.bf16.mxu0 0
  %51 = vmatpush1.bf16.msra.mxu0 %v44
  %52 = vmatprep.subr.bf16.mxu0 0
  %53 = vmatpush1.bf16.msra.mxu0 0
  %54 = vmatprep.subr.bf16.mxu0 0
  %55 = vmatpush1.bf16.msra.mxu0 0
  %56 = vmatprep.subr.bf16.mxu0 0
  %57 = vmatpush1.bf16.msra.mxu0 0
  %58 = vmatprep.subr.bf16.mxu0 0
  %59 = vmatpush1.bf16.msra.mxu0 0
  %60 = vmatprep.subr.bf16.mxu0 0
  %61 = vmatpush1.bf16.msra.mxu0 0
  %62 = vmatprep.subr.bf16.mxu0 0
  %63 = vmatpush1.bf16.msra.mxu0 0
  %64 = vmatprep.subr.bf16.mxu0 0
  %65 = vmatpush1.bf16.msra.mxu0 0
  %66 = vmatprep.subr.bf16.mxu0 0
  %67 = vmatpush1.bf16.msra.mxu0 0
  %68 = vmatprep.subr.bf16.mxu0 0
  %69 = vmatpush1.bf16.msra.mxu0 0
  %70 = vmatprep.subr.bf16.mxu0 0
  %71 = vmatpush1.bf16.msra.mxu0 0
  %72 = vmatprep.subr.bf16.mxu0 0
  %73 = vmatpush1.bf16.msra.mxu0 0
  %74 = vmatprep.subr.bf16.mxu0 0
  %75 = vmatpush1.bf16.msra.mxu0 0
  %76 = vmatprep.subr.bf16.mxu0 0
  %77 = vmatpush1.bf16.msra.mxu0 0
  %78 = vmatprep.subr.bf16.mxu0 0
  %79 = vmatpush1.bf16.msra.mxu0 0
  %80 = vmatprep.subr.bf16.mxu0 0
  %81 = vmatpush1.bf16.msra.mxu0 0
  %82 = vmatprep.mubr.bf16.mxu0 0
  %83 = vmatmul.mubr.bf16.gmra.mrb[0].mxu0 %v48
  %v84 = vpop.f32.mrb[0].mxu0
  %v85 = vadd.f32 %v38, %v84
  %v86 = vpop.f32.mrb[0].mxu0
  %v87 = vpop.f32.mrb[0].mxu0
  %v88 = vpop.f32.mrb[0].mxu0
  %89 = vdwg.mxu0
  %v90 = vmax.f32 %v85, 0.0
  %v91 = vpack.c.bf16 %v90, %v90
  %v92 = vld [vmem:[%s3] sm:$0xf]
  %v93 = vld [vmem:[%s3 + $0x4] sm:$0xf]
  %v94 = vld [vmem:[%s3 + $0x8] sm:$0xf]
  %v95 = vld [vmem:[%s3 + $0xc] sm:$0xf]
  %v96 = vld [vmem:[%s3 + $0x10] sm:$0xf]
  %v97 = vld [vmem:[%s3 + $0x14] sm:$0xf]
  %v98 = vld [vmem:[%s3 + $0x18] sm:$0xf]
  %v99 = vld [vmem:[%s3 + $0x1c] sm:$0xf]
  %v100 = vld [vmem:[%s3 + $0x20] sm:$0xf]
  %v101 = vld [vmem:[%s3 + $0x24] sm:$0xf]
  %v102 = vld [vmem:[%s3 + $0x28] sm:$0xf]
  %v103 = vld [vmem:[%s3 + $0x2c] sm:$0xf]
  %v104 = vld [vmem:[%s3 + $0x30] sm:$0xf]
  %v105 = vld [vmem:[%s3 + $0x34] sm:$0xf]
  %v106 = vld [vmem:[%s3 + $0x38] sm:$0xf]
  %v107 = vld [vmem:[%s3 + $0x3c] sm:$0xf]
  %v108 = vld [vmem:[%s4] sm:$0x1]
  %v110 = vlaneseq
  %v111 = vshrl.u32 %v110, 7
  %v112 = vsub.s32 0, %v111
  %v113 = vrot.slane %v108, %v112
  %v131 = vunpack.c.l.b16 %v92
  %v132 = vunpack.c.l.b16 %v93
  %v133 = vunpack.c.l.b16 %v94
  %v134 = vunpack.c.l.b16 %v95
  %v135 = vunpack.c.l.b16 %v96
  %v136 = vunpack.c.l.b16 %v97
  %v137 = vunpack.c.l.b16 %v98
  %v138 = vunpack.c.l.b16 %v99
  %v139 = vunpack.c.l.b16 %v100
  %v140 = vunpack.c.l.b16 %v101
  %v141 = vunpack.c.l.b16 %v102
  %v142 = vunpack.c.l.b16 %v103
  %v143 = vunpack.c.l.b16 %v104
  %v144 = vunpack.c.l.b16 %v105
  %v145 = vunpack.c.l.b16 %v106
  %v146 = vunpack.c.l.b16 %v107
  %v147 = vpack.c.b16 %v132, %v131
  %v148 = vpack.c.b16 %v134, %v133
  %v149 = vpack.c.b16 %v136, %v135
  %v150 = vpack.c.b16 %v138, %v137
  %v151 = vpack.c.b16 %v140, %v139
  %v152 = vpack.c.b16 %v142, %v141
  %v153 = vpack.c.b16 %v144, %v143
  %v154 = vpack.c.b16 %v146, %v145
  %163 = vmatprep.subr.bf16.mxu0 0
  %164 = vmatpush1.bf16.msra.mxu0 %v147
  %165 = vmatprep.subr.bf16.mxu0 0
  %166 = vmatpush1.bf16.msra.mxu0 %v148
  %167 = vmatprep.subr.bf16.mxu0 0
  %168 = vmatpush1.bf16.msra.mxu0 %v149
  %169 = vmatprep.subr.bf16.mxu0 0
  %170 = vmatpush1.bf16.msra.mxu0 %v150
  %171 = vmatprep.subr.bf16.mxu0 0
  %172 = vmatpush1.bf16.msra.mxu0 %v151
  %173 = vmatprep.subr.bf16.mxu0 0
  %174 = vmatpush1.bf16.msra.mxu0 %v152
  %175 = vmatprep.subr.bf16.mxu0 0
  %176 = vmatpush1.bf16.msra.mxu0 %v153
  %177 = vmatprep.subr.bf16.mxu0 0
  %178 = vmatpush1.bf16.msra.mxu0 %v154
  %179 = vmatprep.subr.bf16.mxu0 0
  %180 = vmatpush1.bf16.msra.mxu0 0
  %181 = vmatprep.subr.bf16.mxu0 0
  %182 = vmatpush1.bf16.msra.mxu0 0
  %183 = vmatprep.subr.bf16.mxu0 0
  %184 = vmatpush1.bf16.msra.mxu0 0
  %185 = vmatprep.subr.bf16.mxu0 0
  %186 = vmatpush1.bf16.msra.mxu0 0
  %187 = vmatprep.subr.bf16.mxu0 0
  %188 = vmatpush1.bf16.msra.mxu0 0
  %189 = vmatprep.subr.bf16.mxu0 0
  %190 = vmatpush1.bf16.msra.mxu0 0
  %191 = vmatprep.subr.bf16.mxu0 0
  %192 = vmatpush1.bf16.msra.mxu0 0
  %193 = vmatprep.subr.bf16.mxu0 0
  %194 = vmatpush1.bf16.msra.mxu0 0
  %195 = vmatprep.mubr.bf16.mxu0 0
  %196 = vmatmul.mubr.bf16.gmra.mrb[0].mxu0 %v91
  %v197 = vpop.f32.mrb[0].mxu0
  %v198 = vadd.f32 %v113, %v197
  %v199 = vpop.f32.mrb[0].mxu0
  %v200 = vpop.f32.mrb[0].mxu0
  %v201 = vpop.f32.mrb[0].mxu0
  %202 = vdwg.mxu0
  %v203 = vmax.f32 %v198, 0.0
  %v204 = vpack.c.bf16 %v203, %v203
  %v205 = vld [vmem:[%s5] sm:$0xff]
  %v206 = vld [vmem:[%s5 + $0x8] sm:$0xff]
  %v207 = vld [vmem:[%s5 + $0x10] sm:$0xff]
  %v208 = vld [vmem:[%s5 + $0x18] sm:$0xff]
  %v209 = vld [vmem:[%s5 + $0x20] sm:$0xff]
  %v210 = vld [vmem:[%s5 + $0x28] sm:$0xff]
  %v211 = vld [vmem:[%s5 + $0x30] sm:$0xff]
  %v212 = vld [vmem:[%s5 + $0x38] sm:$0xff]
  %v213 = vld [vmem:[%s5 + $0x40] sm:$0xff]
  %v214 = vld [vmem:[%s5 + $0x48] sm:$0xff]
  %v215 = vld [vmem:[%s5 + $0x50] sm:$0xff]
  %v216 = vld [vmem:[%s5 + $0x58] sm:$0xff]
  %v217 = vld [vmem:[%s5 + $0x60] sm:$0xff]
  %v218 = vld [vmem:[%s5 + $0x68] sm:$0xff]
  %v219 = vld [vmem:[%s5 + $0x70] sm:$0xff]
  %v220 = vld [vmem:[%s5 + $0x78] sm:$0xff]
  %v221 = vld [vmem:[%s5 + $0x80] sm:$0xff]
  %v222 = vld [vmem:[%s5 + $0x88] sm:$0xff]
  %v223 = vld [vmem:[%s5 + $0x90] sm:$0xff]
  %v224 = vld [vmem:[%s5 + $0x98] sm:$0xff]
  %v225 = vld [vmem:[%s5 + $0xa0] sm:$0xff]
  %v226 = vld [vmem:[%s5 + $0xa8] sm:$0xff]
  %v227 = vld [vmem:[%s5 + $0xb0] sm:$0xff]
  %v228 = vld [vmem:[%s5 + $0xb8] sm:$0xff]
  %v229 = vld [vmem:[%s5 + $0xc0] sm:$0xff]
  %v230 = vld [vmem:[%s5 + $0xc8] sm:$0xff]
  %v231 = vld [vmem:[%s5 + $0xd0] sm:$0xff]
  %v232 = vld [vmem:[%s5 + $0xd8] sm:$0xff]
  %v233 = vld [vmem:[%s5 + $0xe0] sm:$0xff]
  %v234 = vld [vmem:[%s5 + $0xe8] sm:$0xff]
  %v235 = vld [vmem:[%s5 + $0xf0] sm:$0xff]
  %v236 = vld [vmem:[%s5 + $0xf8] sm:$0xff]
  %v237 = vld [vmem:[%s6] sm:$0xf]
  %v239 = vlaneseq
  %v240 = vshrl.u32 %v239, 7
  %v241 = vsub.s32 0, %v240
  %v242 = vrot.slane %v237, %v241
  %v243 = vlaneseq
  %v244 = vshrl.u32 %v243, 7
  %v245 = vsub.s32 1, %v244
  %v246 = vrot.slane %v237, %v245
  %v247 = vlaneseq
  %v248 = vshrl.u32 %v247, 7
  %v249 = vsub.s32 2, %v248
  %v250 = vrot.slane %v237, %v249
  %v251 = vlaneseq
  %v252 = vshrl.u32 %v251, 7
  %v253 = vsub.s32 3, %v252
  %v254 = vrot.slane %v237, %v253
  %v291 = vunpack.c.l.b16 %v205
  %v292 = vunpack.c.h.b16 %v205
  %v293 = vunpack.c.l.b16 %v206
  %v294 = vunpack.c.h.b16 %v206
  %v295 = vunpack.c.l.b16 %v207
  %v296 = vunpack.c.h.b16 %v207
  %v297 = vunpack.c.l.b16 %v208
  %v298 = vunpack.c.h.b16 %v208
  %v299 = vunpack.c.l.b16 %v209
  %v300 = vunpack.c.h.b16 %v209
  %v301 = vunpack.c.l.b16 %v210
  %v302 = vunpack.c.h.b16 %v210
  %v303 = vunpack.c.l.b16 %v211
  %v304 = vunpack.c.h.b16 %v211
  %v305 = vunpack.c.l.b16 %v212
  %v306 = vunpack.c.h.b16 %v212
  %v307 = vunpack.c.l.b16 %v213
  %v308 = vunpack.c.h.b16 %v213
  %v309 = vunpack.c.l.b16 %v214
  %v310 = vunpack.c.h.b16 %v214
  %v311 = vunpack.c.l.b16 %v215
  %v312 = vunpack.c.h.b16 %v215
  %v313 = vunpack.c.l.b16 %v216
  %v314 = vunpack.c.h.b16 %v216
  %v315 = vunpack.c.l.b16 %v217
  %v316 = vunpack.c.h.b16 %v217
  %v317 = vunpack.c.l.b16 %v218
  %v318 = vunpack.c.h.b16 %v218
  %v319 = vunpack.c.l.b16 %v219
  %v320 = vunpack.c.h.b16 %v219
  %v321 = vunpack.c.l.b16 %v220
  %v322 = vunpack.c.h.b16 %v220
  %v323 = vunpack.c.l.b16 %v221
  %v324 = vunpack.c.h.b16 %v221
  %v325 = vunpack.c.l.b16 %v222
  %v326 = vunpack.c.h.b16 %v222
  %v327 = vunpack.c.l.b16 %v223
  %v328 = vunpack.c.h.b16 %v223
  %v329 = vunpack.c.l.b16 %v224
  %v330 = vunpack.c.h.b16 %v224
  %v331 = vunpack.c.l.b16 %v225
  %v332 = vunpack.c.h.b16 %v225
  %v333 = vunpack.c.l.b16 %v226
  %v334 = vunpack.c.h.b16 %v226
  %v335 = vunpack.c.l.b16 %v227
  %v336 = vunpack.c.h.b16 %v227
  %v337 = vunpack.c.l.b16 %v228
  %v338 = vunpack.c.h.b16 %v228
  %v339 = vunpack.c.l.b16 %v229
  %v340 = vunpack.c.h.b16 %v229
  %v341 = vunpack.c.l.b16 %v230
  %v342 = vunpack.c.h.b16 %v230
  %v343 = vunpack.c.l.b16 %v231
  %v344 = vunpack.c.h.b16 %v231
  %v345 = vunpack.c.l.b16 %v232
  %v346 = vunpack.c.h.b16 %v232
  %v347 = vunpack.c.l.b16 %v233
  %v348 = vunpack.c.h.b16 %v233
  %v349 = vunpack.c.l.b16 %v234
  %v350 = vunpack.c.h.b16 %v234
  %v351 = vunpack.c.l.b16 %v235
  %v352 = vunpack.c.h.b16 %v235
  %v353 = vunpack.c.l.b16 %v236
  %v354 = vunpack.c.h.b16 %v236
  %v355 = vpack.c.b16 %v295, %v291
  %v356 = vpack.c.b16 %v296, %v292
  %v357 = vpack.c.b16 %v297, %v293
  %v358 = vpack.c.b16 %v298, %v294
  %v359 = vpack.c.b16 %v303, %v299
  %v360 = vpack.c.b16 %v304, %v300
  %v361 = vpack.c.b16 %v305, %v301
  %v362 = vpack.c.b16 %v306, %v302
  %v363 = vpack.c.b16 %v311, %v307
  %v364 = vpack.c.b16 %v312, %v308
  %v365 = vpack.c.b16 %v313, %v309
  %v366 = vpack.c.b16 %v314, %v310
  %v367 = vpack.c.b16 %v319, %v315
  %v368 = vpack.c.b16 %v320, %v316
  %v369 = vpack.c.b16 %v321, %v317
  %v370 = vpack.c.b16 %v322, %v318
  %v371 = vpack.c.b16 %v327, %v323
  %v372 = vpack.c.b16 %v328, %v324
  %v373 = vpack.c.b16 %v329, %v325
  %v374 = vpack.c.b16 %v330, %v326
  %v375 = vpack.c.b16 %v335, %v331
  %v376 = vpack.c.b16 %v336, %v332
  %v377 = vpack.c.b16 %v337, %v333
  %v378 = vpack.c.b16 %v338, %v334
  %v379 = vpack.c.b16 %v343, %v339
  %v380 = vpack.c.b16 %v344, %v340
  %v381 = vpack.c.b16 %v345, %v341
  %v382 = vpack.c.b16 %v346, %v342
  %v383 = vpack.c.b16 %v351, %v347
  %v384 = vpack.c.b16 %v352, %v348
  %v385 = vpack.c.b16 %v353, %v349
  %v386 = vpack.c.b16 %v354, %v350
  %419 = vmatprep.subr.bf16.mxu0 %v356
  %420 = vmatpush1.bf16.msra.mxu0 %v355
  %421 = vmatprep.subr.bf16.mxu0 %v360
  %422 = vmatpush1.bf16.msra.mxu0 %v359
  %423 = vmatprep.subr.bf16.mxu0 %v364
  %424 = vmatpush1.bf16.msra.mxu0 %v363
  %425 = vmatprep.subr.bf16.mxu0 %v368
  %426 = vmatpush1.bf16.msra.mxu0 %v367
  %427 = vmatprep.subr.bf16.mxu0 %v372
  %428 = vmatpush1.bf16.msra.mxu0 %v371
  %429 = vmatprep.subr.bf16.mxu0 %v376
  %430 = vmatpush1.bf16.msra.mxu0 %v375
  %431 = vmatprep.subr.bf16.mxu0 %v380
  %432 = vmatpush1.bf16.msra.mxu0 %v379
  %433 = vmatprep.subr.bf16.mxu0 %v384
  %434 = vmatpush1.bf16.msra.mxu0 %v383
  %435 = vmatprep.subr.bf16.mxu0 0
  %436 = vmatpush1.bf16.msra.mxu0 0
  %437 = vmatprep.subr.bf16.mxu0 0
  %438 = vmatpush1.bf16.msra.mxu0 0
  %439 = vmatprep.subr.bf16.mxu0 0
  %440 = vmatpush1.bf16.msra.mxu0 0
  %441 = vmatprep.subr.bf16.mxu0 0
  %442 = vmatpush1.bf16.msra.mxu0 0
  %443 = vmatprep.subr.bf16.mxu0 0
  %444 = vmatpush1.bf16.msra.mxu0 0
  %445 = vmatprep.subr.bf16.mxu0 0
  %446 = vmatpush1.bf16.msra.mxu0 0
  %447 = vmatprep.subr.bf16.mxu0 0
  %448 = vmatpush1.bf16.msra.mxu0 0
  %449 = vmatprep.subr.bf16.mxu0 0
  %450 = vmatpush1.bf16.msra.mxu0 0
  %451 = vmatprep.mubr.bf16.mxu0 0
  %452 = vmatmul.mubr.bf16.gmra.mrb[0].mxu0 %v204
  %v453 = vpop.f32.mrb[0].mxu0
  %v454 = vadd.f32 %v242, %v453
  %v455 = vpop.f32.mrb[0].mxu0
  %v456 = vadd.f32 %v246, %v455
  %v457 = vpop.f32.mrb[0].mxu0
  %v458 = vpop.f32.mrb[0].mxu0
  %459 = vdwg.mxu0
  %460 = vmatprep.subr.bf16.mxu0 %v358
  %461 = vmatpush1.bf16.msra.mxu0 %v357
  %462 = vmatprep.subr.bf16.mxu0 %v362
  %463 = vmatpush1.bf16.msra.mxu0 %v361
  %464 = vmatprep.subr.bf16.mxu0 %v366
  %465 = vmatpush1.bf16.msra.mxu0 %v365
  %466 = vmatprep.subr.bf16.mxu0 %v370
  %467 = vmatpush1.bf16.msra.mxu0 %v369
  %468 = vmatprep.subr.bf16.mxu0 %v374
  %469 = vmatpush1.bf16.msra.mxu0 %v373
  %470 = vmatprep.subr.bf16.mxu0 %v378
  %471 = vmatpush1.bf16.msra.mxu0 %v377
  %472 = vmatprep.subr.bf16.mxu0 %v382
  %473 = vmatpush1.bf16.msra.mxu0 %v381
  %474 = vmatprep.subr.bf16.mxu0 %v386
  %475 = vmatpush1.bf16.msra.mxu0 %v385
  %476 = vmatprep.subr.bf16.mxu0 0
  %477 = vmatpush1.bf16.msra.mxu0 0
  %478 = vmatprep.subr.bf16.mxu0 0
  %479 = vmatpush1.bf16.msra.mxu0 0
  %480 = vmatprep.subr.bf16.mxu0 0
  %481 = vmatpush1.bf16.msra.mxu0 0
  %482 = vmatprep.subr.bf16.mxu0 0
  %483 = vmatpush1.bf16.msra.mxu0 0
  %484 = vmatprep.subr.bf16.mxu0 0
  %485 = vmatpush1.bf16.msra.mxu0 0
  %486 = vmatprep.subr.bf16.mxu0 0
  %487 = vmatpush1.bf16.msra.mxu0 0
  %488 = vmatprep.subr.bf16.mxu0 0
  %489 = vmatpush1.bf16.msra.mxu0 0
  %490 = vmatprep.subr.bf16.mxu0 0
  %491 = vmatpush1.bf16.msra.mxu0 0
  %492 = vmatprep.mubr.bf16.mxu0 0
  %493 = vmatmul.mubr.bf16.gmra.mrb[0].mxu0 %v204
  %v494 = vpop.f32.mrb[0].mxu0
  %v495 = vadd.f32 %v250, %v494
  %v496 = vpop.f32.mrb[0].mxu0
  %v497 = vadd.f32 %v254, %v496
  %v498 = vpop.f32.mrb[0].mxu0
  %v499 = vpop.f32.mrb[0].mxu0
  %500 = vdwg.mxu0
  %v501 = vld [vmem:[%s7] sm:$0x1]
  %v502 = vlaneseq
  %v503 = vand.u32 %v502, 127
  %504 = vmax.xlane.f32.xlu0 %v454
  %v505 = vpop.xlane.xlu0 %504
  %v506 = vsub.f32 %v454, %v505
  %v507 = vmul.f32 %v506, 1.442695
  %v508 = vpow.pop %v507
  %509 = vadd.xlane.f32.xlu0 %v508
  %v510 = vpop.xlane.xlu0 %509
  %v511 = vrcp.pop %v510
  %v512 = vmul.f32 %v508, %v511
  %v513 = vmax.f32 %v512, 0.001
  %v515 = vlaneseq
  %v516 = vshrl.u32 %v515, 7
  %v517 = vsub.s32 0, %v516
  %v518 = vrot.slane %v501, %v517
  %v520 = vmul.f32 %v513, %v518
  %521 = vadd.xlane.f32.xlu0 %v520
  %v522 = vpop.xlane.xlu0 %521
  %vm523 = vcmp.eq.s32.totalorder %v503, 0
  %v524 = vsel %vm523, %v522, 0.0
  %525 = vmax.xlane.f32.xlu0 %v456
  %v526 = vpop.xlane.xlu0 %525
  %v527 = vsub.f32 %v456, %v526
  %v528 = vmul.f32 %v527, 1.442695
  %v529 = vpow.pop %v528
  %530 = vadd.xlane.f32.xlu0 %v529
  %v531 = vpop.xlane.xlu0 %530
  %v532 = vrcp.pop %v531
  %v533 = vmul.f32 %v529, %v532
  %v534 = vmax.f32 %v533, 0.001
  %v535 = vmul.f32 %v534, %v518
  %536 = vadd.xlane.f32.xlu0 %v535
  %v537 = vpop.xlane.xlu0 %536
  %vm538 = vcmp.eq.s32.totalorder %v503, 1
  %v539 = vsel %vm538, %v537, %v524
  %540 = vmax.xlane.f32.xlu0 %v495
  %v541 = vpop.xlane.xlu0 %540
  %v542 = vsub.f32 %v495, %v541
  %v543 = vmul.f32 %v542, 1.442695
  %v544 = vpow.pop %v543
  %545 = vadd.xlane.f32.xlu0 %v544
  %v546 = vpop.xlane.xlu0 %545
  %v547 = vrcp.pop %v546
  %v548 = vmul.f32 %v544, %v547
  %v549 = vmax.f32 %v548, 0.001
  %v550 = vmul.f32 %v549, %v518
  %551 = vadd.xlane.f32.xlu0 %v550
  %v552 = vpop.xlane.xlu0 %551
  %vm553 = vcmp.eq.s32.totalorder %v503, 2
  %v554 = vsel %vm553, %v552, %v539
  %555 = vmax.xlane.f32.xlu0 %v497
  %v556 = vpop.xlane.xlu0 %555
  %v557 = vsub.f32 %v497, %v556
  %v558 = vmul.f32 %v557, 1.442695
  %v559 = vpow.pop %v558
  %560 = vadd.xlane.f32.xlu0 %v559
  %v561 = vpop.xlane.xlu0 %560
  %v562 = vrcp.pop %v561
  %v563 = vmul.f32 %v559, %v562
  %v564 = vmax.f32 %v563, 0.001
  %v565 = vmul.f32 %v564, %v518
  %566 = vadd.xlane.f32.xlu0 %v565
  %v567 = vpop.xlane.xlu0 %566
  %vm568 = vcmp.eq.s32.totalorder %v503, 3
  %v569 = vsel %vm568, %v567, %v554
  %570 = vst [vmem:[%s8] sm:$0xff] %v569
  // Predicated region
  $region34: #{distributional_dqn_forward.1} parent=0 // pred_check
    _
  $region35: #{distributional_dqn_forward.1} parent=0 // pred_check_branch
    %572 = sbr.rel (0) target = $region37
  $region36: #{distributional_dqn_forward.1} parent=0 // pred_region
    _
  $region37: #{distributional_dqn_forward.1} parent=0 // pred_fallthru
    _
  // Predicated region
  $region38: #{distributional_dqn_forward.1} parent=0 // pred_check
    _
  $region39: #{distributional_dqn_forward.1} parent=0 // pred_check_branch
    %574 = sbr.rel (0) target = $region41
  $region40: #{distributional_dqn_forward.1} parent=0 // pred_region
    _
  $region41: #{distributional_dqn_forward.1} parent=0 // pred_fallthru
    _

</llo_original>
